<compile_context>
chip_gen: v7x
topology: tpu7x:2x2x1
jax: 0.10.0
libtpu: 0.0.40
codegen_flags: <defaults>
</compile_context>

<pallas_src>
import jax
import jax.numpy as jnp
from jax.experimental import pallas as pl
from jax.experimental.pallas import tpu as pltpu


def _l1_loss_kernel(pre_ref, gt_ref, mask_ref, out_ref):
    # Tiles are (TR, L): one flattened (batch, channel) slice per row.
    pre = pre_ref[...].astype(jnp.float32)
    gt = gt_ref[...].astype(jnp.float32)
    mask = mask_ref[...].astype(jnp.float32)

    # Per-row masked L1 sum and strictly-nonzero count (lane reduction -> (TR, 1)).
    row_sum = jnp.sum(jnp.abs(pre - gt) * mask, axis=-1, keepdims=True)
    nnz = jnp.sum((mask != 0.0).astype(jnp.float32), axis=-1, keepdims=True)
    nnz = jnp.maximum(nnz, 1.0)  # matches the `if nonzero_num == 0: nonzero_num = 1` branch

    # Exact division (once per row) to keep bit-level parity with the reference.
    out_ref[...] = row_sum / nnz


def l1_loss(pre, gt, mask, batch_size=None):
    assert pre.shape == gt.shape == mask.shape
    B, C, H, W = pre.shape
    if batch_size is None:
        batch_size = B

    R = B * C          # one row per (batch, channel)
    L = H * W          # flattened spatial dim -> lanes

    pre2 = pre.reshape(R, L)
    gt2 = gt.reshape(R, L)
    mask2 = mask.reshape(R, L)

    # Pad lanes to a multiple of 128 so loads/stores are unmasked full vregs.
    L_pad = ((L + 127) // 128) * 128
    bytes_per_row = L_pad * 4

    # Row-tile size: multiple of 8, ~2 MiB/input block budget, never larger than
    # the (8-rounded) row count so tiny inputs are not over-padded.
    target_block_bytes = 2 * 1024 * 1024
    tr_budget = max(8, (target_block_bytes // bytes_per_row) // 8 * 8)
    tr = min(tr_budget, ((R + 7) // 8) * 8)
    R_pad = ((R + tr - 1) // tr) * tr

    if L_pad != L or R_pad != R:
        pad = ((0, R_pad - R), (0, L_pad - L))
        pre2 = jnp.pad(pre2, pad)
        gt2 = jnp.pad(gt2, pad)
        mask2 = jnp.pad(mask2, pad)

    grid = (R_pad // tr,)
    in_spec = pl.BlockSpec((tr, L_pad), lambda i: (i, 0))
    out_spec = pl.BlockSpec((tr, 1), lambda i: (i, 0))

    # 3 inputs x 2 pipeline buffers + tiny output; keep the scoped limit generous but
    # well under v7x's 64 MiB physical VMEM.
    vmem_bytes = 3 * 2 * tr * L_pad * 4 + 4 * tr * 4 + (1 << 20)
    vmem_bytes = int(min(max(vmem_bytes, 8 << 20), 48 << 20))

    per_row = pl.pallas_call(
        _l1_loss_kernel,
        out_shape=jax.ShapeDtypeStruct((R_pad, 1), jnp.float32),
        grid=grid,
        in_specs=[in_spec, in_spec, in_spec],
        out_specs=out_spec,
        compiler_params=pltpu.CompilerParams(
            dimension_semantics=("parallel",),
            vmem_limit_bytes=vmem_bytes,
        ),
    )(pre2, gt2, mask2)

    # Padded rows are all-zero -> contribute 0; slice anyway and reduce on the host side.
    return jnp.sum(per_row[:R, 0]) / jnp.float32(batch_size)


def _l1_loss_ref(pre, gt, mask):
    # Pure-JAX reference with identical semantics (verification only).
    B = pre.shape[0]
    nnz = jnp.maximum(jnp.sum((mask != 0.0).astype(jnp.float32), axis=(2, 3)), 1.0)
    per_ch = jnp.sum(jnp.abs(pre - gt) * mask, axis=(2, 3))
    return jnp.sum(per_ch / nnz) / B


if __name__ == "__main__":
    key = jax.random.PRNGKey(0)
    k1, k2, k3 = jax.random.split(key, 3)

    B, C, H, W = 2, 4, 16, 16
    pre = jax.random.normal(k1, (B, C, H, W), dtype=jnp.float32)
    gt = jax.random.normal(k2, (B, C, H, W), dtype=jnp.float32)
    mask = (jax.random.uniform(k3, (B, C, H, W)) > 0.5).astype(jnp.float32)
    # Exercise the nonzero_num == 0 -> 1 branch on one channel.
    mask = mask.at[0, 0].set(0.0)

    loss = jax.block_until_ready(l1_loss(pre, gt, mask, batch_size=B))
    ref = jax.block_until_ready(_l1_loss_ref(pre, gt, mask))

    assert jnp.allclose(loss, ref, rtol=1e-5, atol=1e-6), (loss, ref)
    print("KERNEL_OK")
</pallas_src>

<mosaic_0001>
module attributes {stable_mosaic.version = 11 : i64} {
  func.func @_l1_loss_kernel(%arg0: i32, %arg1: memref<8x256xf32, #tpu.memory_space<vmem>>, %arg2: memref<8x256xf32, #tpu.memory_space<vmem>>, %arg3: memref<8x256xf32, #tpu.memory_space<vmem>>, %arg4: memref<8x1xf32, #tpu.memory_space<vmem>>) attributes {dimension_semantics = [#tpu.dimension_semantics<parallel>], iteration_bounds = array<i64: 1>, scalar_prefetch = 0 : i64, scratch_operands = 0 : i64, tpu.core_type = #tpu.core_type<tc>, window_params = [{transform_indices = @transform_0, window_bounds = array<i64: 8, 256>}, {transform_indices = @transform_1, window_bounds = array<i64: 8, 256>}, {transform_indices = @transform_2, window_bounds = array<i64: 8, 256>}, {transform_indices = @transform_3, window_bounds = array<i64: 8, 1>}]} {
    %c0 = arith.constant 0 : index
    %c0_0 = arith.constant 0 : index
    %0 = vector.load %arg1[%c0, %c0_0] : memref<8x256xf32, #tpu.memory_space<vmem>>, vector<8x256xf32>
    %c0_1 = arith.constant 0 : index
    %c0_2 = arith.constant 0 : index
    %1 = vector.load %arg2[%c0_1, %c0_2] : memref<8x256xf32, #tpu.memory_space<vmem>>, vector<8x256xf32>
    %c0_3 = arith.constant 0 : index
    %c0_4 = arith.constant 0 : index
    %2 = vector.load %arg3[%c0_3, %c0_4] : memref<8x256xf32, #tpu.memory_space<vmem>>, vector<8x256xf32>
    %3 = arith.subf %0, %1 : vector<8x256xf32>
    %4 = math.absf %3 : vector<8x256xf32>
    %5 = arith.mulf %4, %2 : vector<8x256xf32>
    %cst = arith.constant dense<0.000000e+00> : vector<8xf32>
    %6 = vector.multi_reduction <add>, %5, %cst [1] : vector<8x256xf32> to vector<8xf32>
    %7 = vector.shape_cast %6 : vector<8xf32> to vector<8x1xf32>
    %cst_5 = arith.constant 0.000000e+00 : f32
    %8 = vector.broadcast %cst_5 : f32 to vector<8x256xf32>
    %9 = arith.cmpf one, %2, %8 : vector<8x256xf32>
    %10 = arith.extui %9 : vector<8x256xi1> to vector<8x256xi32>
    %11 = arith.sitofp %10 : vector<8x256xi32> to vector<8x256xf32>
    %cst_6 = arith.constant dense<0.000000e+00> : vector<8xf32>
    %12 = vector.multi_reduction <add>, %11, %cst_6 [1] : vector<8x256xf32> to vector<8xf32>
    %13 = vector.shape_cast %12 : vector<8xf32> to vector<8x1xf32>
    %cst_7 = arith.constant 1.000000e+00 : f32
    %14 = vector.broadcast %cst_7 : f32 to vector<8x1xf32>
    %15 = arith.maximumf %13, %14 : vector<8x1xf32>
    %16 = arith.divf %7, %15 : vector<8x1xf32>
    %c0_8 = arith.constant 0 : index
    %c0_9 = arith.constant 0 : index
    %17 = vector.load %arg4[%c0_8, %c0_9] : memref<8x1xf32, #tpu.memory_space<vmem>>, vector<8x1xf32>
    tpu.vector_store %arg4[%c0_8, %c0_9], %16 {strides = array<i32>} : memref<8x1xf32, #tpu.memory_space<vmem>>, vector<8x1xf32>,
    return
  }
  func.func @transform_0(%arg0: i32) -> (i32, i32) {
    %c0_i32 = arith.constant 0 : i32
    %c0_i32_0 = arith.constant 0 : i32
    return %arg0, %c0_i32 : i32, i32
  }
  func.func @transform_1(%arg0: i32) -> (i32, i32) {
    %c0_i32 = arith.constant 0 : i32
    %c0_i32_0 = arith.constant 0 : i32
    return %arg0, %c0_i32 : i32, i32
  }
  func.func @transform_2(%arg0: i32) -> (i32, i32) {
    %c0_i32 = arith.constant 0 : i32
    %c0_i32_0 = arith.constant 0 : i32
    return %arg0, %c0_i32 : i32, i32
  }
  func.func @transform_3(%arg0: i32) -> (i32, i32) {
    %c0_i32 = arith.constant 0 : i32
    %c0_i32_0 = arith.constant 0 : i32
    return %arg0, %c0_i32 : i32, i32
  }
}

</mosaic_0001>

<llo_original>
// kernel: tpu_custom_call.1
$region0: #{tpu_custom_call.1}
  #allocation0 [shape = 'u32[]', space=smem, size = 0x4, offset = 0x4, fixed_abs, tag = 'smem constant byte address 0x4 - core index']
  #allocation1 [shape = 'u32[144,128]{1,0:T(1,128)}', space=vmem, size = 0x12000, scoped, tag = 'internal scratch']
  %s0 = inlined_call_operand.hbm [shape: f32[8,256], index: 0, kind: input, shape index: {}]
  %s1 = inlined_call_operand.hbm [shape: f32[8,256], index: 1, kind: input, shape index: {}]
  %s2 = inlined_call_operand.hbm [shape: f32[8,256], index: 2, kind: input, shape index: {}]
  %s3 = inlined_call_operand.vmem [shape: f32[8,1], index: 3, kind: output, shape index: {}]
  %s4 = sld [smem:[#allocation0]]
  $region34: #{tpu_custom_call.1} parent=0
    _
  %s6 = ssub.s32 1, %s4
  %s7 = scalar_select 0, %s6, %s4
  $region1: #{tpu_custom_call.1} parent=0
    #allocation2 [shape = 'u8[8192]{0}', space=vmem, size = 0x2000, scoped, tag = 'input window, operand 0, single buffered']
    #allocation3 [shape = 's32[1]{0}', space=sflag, size = 0x4, scoped, tag = 'scoped memory for tpu_custom_call.1']
    #allocation4 [shape = 'u8[8192]{0}', space=vmem, size = 0x2000, scoped, tag = 'input window, operand 1, single buffered']
    #allocation5 [shape = 's32[1]{0}', space=sflag, size = 0x4, scoped, tag = 'scoped memory for tpu_custom_call.1']
    #allocation6 [shape = 'u8[8192]{0}', space=vmem, size = 0x2000, scoped, tag = 'input window, operand 2, single buffered']
    %8 = vsyncpa [#allocation3], 0
    %9 = vsyncpa [#allocation5], 0
    // Predicated region
    $region2: #{tpu_custom_call.1} parent=1 // pred_check
      _
    $region3: #{tpu_custom_call.1} parent=1 // pred_check_branch
      %11 = sbr.rel (0) target = $region5
    $region4: #{tpu_custom_call.1} parent=1 // pred_region
      %s13 = ssub.s32 256, 256
      %14 = vsyncadd [#allocation3], %s13
      %s16 = sshll.u32 [#allocation2], 4
      %s17 = int_to_ptr.vmem [resolvable:$true] %s16
      %19 = dma.hbm_to_vmem [thread:$0]  %s0, 256, %s17, [#allocation3]
    $region5: #{tpu_custom_call.1} parent=1 // pred_fallthru
      _
    // Predicated region
    $region6: #{tpu_custom_call.1} parent=1 // pred_check
      _
    $region7: #{tpu_custom_call.1} parent=1 // pred_check_branch
      %21 = sbr.rel (0) target = $region9
    $region8: #{tpu_custom_call.1} parent=1 // pred_region
      %s23 = ssub.s32 256, 256
      %24 = vsyncadd [#allocation5], %s23
      %s26 = sshll.u32 [#allocation4], 4
      %s27 = int_to_ptr.vmem [resolvable:$true] %s26
      %29 = dma.hbm_to_vmem [thread:$0]  %s1, 256, %s27, [#allocation5]
    $region9: #{tpu_custom_call.1} parent=1 // pred_fallthru
      _
    // Predicated region
    $region10: #{tpu_custom_call.1} parent=1 // pred_check
      _
    $region11: #{tpu_custom_call.1} parent=1 // pred_check_branch
      %31 = sbr.rel (0) target = $region13
    $region12: #{tpu_custom_call.1} parent=1 // pred_region
      %s33 = ssub.s32 256, 256
      %34 = vsyncadd [#allocation5], %s33
      %s36 = sshll.u32 [#allocation6], 4
      %s37 = int_to_ptr.vmem [resolvable:$true] %s36
      %39 = dma.hbm_to_vmem [thread:$0]  %s2, 256, %s37, [#allocation5]
    $region13: #{tpu_custom_call.1} parent=1 // pred_fallthru
      _
    // Predicated region
    $region14: #{tpu_custom_call.1} parent=1 // pred_check
      _
    $region15: #{tpu_custom_call.1} parent=1 // pred_check_branch
      %41 = sbr.rel (0) target = $region17
    $region16: #{tpu_custom_call.1} parent=1 // pred_region
      %42 = dma.done [#allocation3], 256
    $region17: #{tpu_custom_call.1} parent=1 // pred_fallthru
      _
    // Predicated region
    $region18: #{tpu_custom_call.1} parent=1 // pred_check
      _
    $region19: #{tpu_custom_call.1} parent=1 // pred_check_branch
      %44 = sbr.rel (0) target = $region21
    $region20: #{tpu_custom_call.1} parent=1 // pred_region
      %45 = dma.done [#allocation5], 256
    $region21: #{tpu_custom_call.1} parent=1 // pred_fallthru
      _
    // Predicated region
    $region22: #{tpu_custom_call.1} parent=1 // pred_check
      _
    $region23: #{tpu_custom_call.1} parent=1 // pred_check_branch
      %47 = sbr.rel (0) target = $region25
    $region24: #{tpu_custom_call.1} parent=1 // pred_region
      %48 = dma.done [#allocation5], 256
    $region25: #{tpu_custom_call.1} parent=1 // pred_fallthru
      _
    %v49 = vld [vmem:[#allocation2] sm:$0xff]
    %v50 = vld [vmem:[#allocation2 + $0x8] sm:$0xff]
    %v51 = vld [vmem:[#allocation4] sm:$0xff]
    %v52 = vld [vmem:[#allocation4 + $0x8] sm:$0xff]
    %v53 = vld [vmem:[#allocation6] sm:$0xff]
    %v54 = vld [vmem:[#allocation6 + $0x8] sm:$0xff]
    %v55 = vsub.f32 %v49, %v51
    %v56 = vsub.f32 %v50, %v52
    %v57 = vand.u32 2147483647, %v55
    %v58 = vand.u32 2147483647, %v56
    %v59 = vmul.f32 %v57, %v53
    %v60 = vmul.f32 %v58, %v54
    %v61 = vadd.f32 %v59, %v60
    %62 = vadd.xlane.f32.xlu0 %v61
    %v63 = vpop.xlane.xlu0 %62
    %vm64 = vcmp.ne.f32.partialorder %v53, 0.0
    %vm65 = vcmp.ne.f32.partialorder %v54, 0.0
    %v66 = vsel %vm64, 1, 0
    %v67 = vsel %vm65, 1, 0
    %v68 = vcvt.s32.f32 %v66
    %v69 = vcvt.s32.f32 %v67
    %v70 = vadd.f32 %v68, %v69
    %71 = vadd.xlane.f32.xlu0 %v70
    %v72 = vpop.xlane.xlu0 %71
    %v73 = vmax.f32 %v72, 1.0
    %v74 = vrcp.pop %v73
    %v75 = vmul.f32 %v63, %v74
    %vm76 = vcmask 7168
    %77 = vst.msk [vmem:[%s3] sm:$0xff] %vm76, %v75
    // Predicated region
    $region26: #{tpu_custom_call.1} parent=1 // pred_check
      _
    $region27: #{tpu_custom_call.1} parent=1 // pred_check_branch
      %79 = sbr.rel (0) target = $region29
    $region28: #{tpu_custom_call.1} parent=1 // pred_region
      _
    $region29: #{tpu_custom_call.1} parent=1 // pred_fallthru
      _
    // Predicated region
    $region30: #{tpu_custom_call.1} parent=1 // pred_check
      _
    $region31: #{tpu_custom_call.1} parent=1 // pred_check_branch
      %81 = sbr.rel (0) target = $region33
    $region32: #{tpu_custom_call.1} parent=1 // pred_region
      _
    $region33: #{tpu_custom_call.1} parent=1 // pred_fallthru
      _
    %82 = vsyncpa [#allocation3], 1
    %83 = vsyncpa [#allocation5], 1

</llo_original>
